<compile_context>
chip_gen: v5e
topology: v5e:2x2
jax: 0.10.0
libtpu: 0.0.40
codegen_flags: <defaults>
</compile_context>

<pallas_src>
import functools
import math

import jax
import jax.numpy as jnp
from jax import lax
from jax.experimental import pallas as pl
from jax.experimental.pallas import tpu as pltpu


def _pe_dropout_kernel(seed_ref, x_ref, pe_ref, o_ref, *, p, block_s):
    # x_ref: (block_s, B, D), pe_ref: (block_s, 1, D) -> broadcast over batch.
    z = x_ref[...] + pe_ref[...]

    if p > 0.0:
        bs, nb, nd = z.shape
        # Global linear element index (counter for the stateless PRNG).
        s_base = pl.program_id(0) * block_s
        s_idx = lax.broadcasted_iota(jnp.int32, z.shape, 0) + s_base
        b_idx = lax.broadcasted_iota(jnp.int32, z.shape, 1)
        d_idx = lax.broadcasted_iota(jnp.int32, z.shape, 2)
        lin = (s_idx * nb + b_idx) * nd + d_idx

        # splitmix32-style finalizer, seed mixed in with a golden-ratio scramble.
        h = lin.astype(jnp.uint32)
        h = h + seed_ref[0].astype(jnp.uint32) * jnp.uint32(0x9E3779B9)
        h = h ^ (h >> 16)
        h = h * jnp.uint32(0x7FEB352D)
        h = h ^ (h >> 15)
        h = h * jnp.uint32(0x846CA68B)
        h = h ^ (h >> 16)

        # Top 24 bits -> integer threshold compare (keep with prob 1-p).
        r = (h >> 8).astype(jnp.int32)            # uniform in [0, 2^24)
        thr = int(round(p * float(1 << 24)))
        keep = r >= thr
        z = jnp.where(keep, z * (1.0 / (1.0 - p)), 0.0)

    o_ref[...] = z


def make_positional_encoding(d_model, max_len=5000):
    """Builds the (max_len, 1, d_model) buffer exactly like the PyTorch module."""
    position = jnp.arange(max_len, dtype=jnp.float32)[:, None]
    div_term = jnp.exp(
        jnp.arange(0, d_model, 2, dtype=jnp.float32) * (-math.log(10000.0) / d_model))
    ang = position * div_term                     # (max_len, d_model//2)
    pe = jnp.zeros((max_len, d_model), jnp.float32)
    pe = pe.at[:, 0::2].set(jnp.sin(ang))
    pe = pe.at[:, 1::2].set(jnp.cos(ang))
    return pe[:, None, :]                         # (max_len, 1, d_model)


def positional_encoding_forward(x, pe, *, dropout_p=0.1, seed=0, block_s=None):
    """x: (S, B, D) f32; pe: (max_len, 1, D) f32 with max_len >= S."""
    s_len, batch, d_model = x.shape
    max_len = pe.shape[0]
    assert pe.shape == (max_len, 1, d_model) and s_len <= max_len

    if block_s is None:
        # Single grid step at small sizes; tile long sequences for pipelining /
        # megacore sharding on v7x.
        block_s = s_len if s_len <= 256 else 256
    grid = (pl.cdiv(s_len, block_s),)

    kernel = functools.partial(_pe_dropout_kernel,
                               p=float(dropout_p), block_s=block_s)

    grid_spec = pltpu.PrefetchScalarGridSpec(
        num_scalar_prefetch=1,
        grid=grid,
        in_specs=[
            pl.BlockSpec((block_s, batch, d_model), lambda i, s: (i, 0, 0)),  # x
            pl.BlockSpec((block_s, 1, d_model), lambda i, s: (i, 0, 0)),      # pe[:S]
        ],
        out_specs=pl.BlockSpec((block_s, batch, d_model), lambda i, s: (i, 0, 0)),
    )

    seed_arr = jnp.array([seed], dtype=jnp.int32)
    return pl.pallas_call(
        kernel,
        out_shape=jax.ShapeDtypeStruct((s_len, batch, d_model), jnp.float32),
        grid_spec=grid_spec,
        compiler_params=pltpu.CompilerParams(
            dimension_semantics=("parallel",)),
    )(seed_arr, jnp.asarray(x, jnp.float32), jnp.asarray(pe, jnp.float32))


if __name__ == "__main__":
    d_model = 32
    seq_len = 8
    batch = 2
    dropout_p = 0.1
    max_len = 5000

    key = jax.random.PRNGKey(0)
    x = jax.random.normal(key, (seq_len, batch, d_model), dtype=jnp.float32)
    pe = make_positional_encoding(d_model, max_len=max_len)

    out = positional_encoding_forward(x, pe, dropout_p=dropout_p, seed=42)
    out = jax.block_until_ready(out)
    assert out.shape == (seq_len, batch, d_model)
    assert bool(jnp.all(jnp.isfinite(out)))
    print("KERNEL_OK")
</pallas_src>

<mosaic_0001>
module attributes {stable_mosaic.version = 11 : i64} {
  func.func @_pe_dropout_kernel(%arg0: i32, %arg1: memref<1xi32, #tpu.memory_space<smem>>, %arg2: memref<8x2x32xf32, #tpu.memory_space<vmem>>, %arg3: memref<8x1x32xf32, #tpu.memory_space<vmem>>, %arg4: memref<8x2x32xf32, #tpu.memory_space<vmem>>) attributes {dimension_semantics = [#tpu.dimension_semantics<parallel>], iteration_bounds = array<i64: 1>, scalar_prefetch = 1 : i64, scratch_operands = 0 : i64, tpu.core_type = #tpu.core_type<tc>, window_params = [{transform_indices = @transform_0, window_bounds = array<i64: 8, 2, 32>}, {transform_indices = @transform_1, window_bounds = array<i64: 8, 1, 32>}, {transform_indices = @transform_2, window_bounds = array<i64: 8, 2, 32>}]} {
    %c0 = arith.constant 0 : index
    %c0_0 = arith.constant 0 : index
    %c0_1 = arith.constant 0 : index
    %0 = vector.load %arg2[%c0, %c0_0, %c0_1] : memref<8x2x32xf32, #tpu.memory_space<vmem>>, vector<8x2x32xf32>
    %c0_2 = arith.constant 0 : index
    %c0_3 = arith.constant 0 : index
    %c0_4 = arith.constant 0 : index
    %1 = vector.load %arg3[%c0_2, %c0_3, %c0_4] : memref<8x1x32xf32, #tpu.memory_space<vmem>>, vector<8x1x32xf32>
    %2 = vector.broadcast %1 : vector<8x1x32xf32> to vector<8x2x32xf32>
    %3 = arith.addf %0, %2 : vector<8x2x32xf32>
    %c8_i32 = arith.constant 8 : i32
    %4 = arith.muli %arg0, %c8_i32 : i32
    %5 = tpu.iota {dimensions = array<i32: 0>} : vector<8x2x32xi32>
    %6 = vector.broadcast %4 : i32 to vector<8x2x32xi32>
    %7 = arith.addi %5, %6 : vector<8x2x32xi32>
    %8 = tpu.iota {dimensions = array<i32: 1>} : vector<8x2x32xi32>
    %9 = tpu.iota {dimensions = array<i32: 2>} : vector<8x2x32xi32>
    %c2_i32 = arith.constant 2 : i32
    %10 = vector.broadcast %c2_i32 : i32 to vector<8x2x32xi32>
    %11 = arith.muli %7, %10 : vector<8x2x32xi32>
    %12 = arith.addi %11, %8 : vector<8x2x32xi32>
    %c32_i32 = arith.constant 32 : i32
    %13 = vector.broadcast %c32_i32 : i32 to vector<8x2x32xi32>
    %14 = arith.muli %12, %13 : vector<8x2x32xi32>
    %15 = arith.addi %14, %9 : vector<8x2x32xi32>
    %c0_5 = arith.constant 0 : index
    %16 = memref.load %arg1[%c0_5] : memref<1xi32, #tpu.memory_space<smem>>
    %c-1640531527_i32 = arith.constant -1640531527 : i32
    %17 = arith.muli %16, %c-1640531527_i32 : i32
    %18 = vector.broadcast %17 : i32 to vector<8x2x32xi32>
    %19 = arith.addi %15, %18 : vector<8x2x32xi32>
    %c16_i32 = arith.constant 16 : i32
    %20 = vector.broadcast %c16_i32 : i32 to vector<8x2x32xi32>
    %21 = arith.shrui %19, %20 : vector<8x2x32xi32>
    %22 = arith.xori %19, %21 : vector<8x2x32xi32>
    %c2146121005_i32 = arith.constant 2146121005 : i32
    %23 = vector.broadcast %c2146121005_i32 : i32 to vector<8x2x32xi32>
    %24 = arith.muli %22, %23 : vector<8x2x32xi32>
    %c15_i32 = arith.constant 15 : i32
    %25 = vector.broadcast %c15_i32 : i32 to vector<8x2x32xi32>
    %26 = arith.shrui %24, %25 : vector<8x2x32xi32>
    %27 = arith.xori %24, %26 : vector<8x2x32xi32>
    %c-2073254261_i32 = arith.constant -2073254261 : i32
    %28 = vector.broadcast %c-2073254261_i32 : i32 to vector<8x2x32xi32>
    %29 = arith.muli %27, %28 : vector<8x2x32xi32>
    %c16_i32_6 = arith.constant 16 : i32
    %30 = vector.broadcast %c16_i32_6 : i32 to vector<8x2x32xi32>
    %31 = arith.shrui %29, %30 : vector<8x2x32xi32>
    %32 = arith.xori %29, %31 : vector<8x2x32xi32>
    %c8_i32_7 = arith.constant 8 : i32
    %33 = vector.broadcast %c8_i32_7 : i32 to vector<8x2x32xi32>
    %34 = arith.shrui %32, %33 : vector<8x2x32xi32>
    %c1677722_i32 = arith.constant 1677722 : i32
    %35 = vector.broadcast %c1677722_i32 : i32 to vector<8x2x32xi32>
    %36 = arith.cmpi sge, %34, %35 : vector<8x2x32xi32>
    %cst = arith.constant 1.11111116 : f32
    %37 = vector.broadcast %cst : f32 to vector<8x2x32xf32>
    %38 = arith.mulf %3, %37 : vector<8x2x32xf32>
    %cst_8 = arith.constant 0.000000e+00 : f32
    %39 = vector.broadcast %cst_8 : f32 to vector<8x2x32xf32>
    %40 = arith.select %36, %38, %39 : vector<8x2x32xi1>, vector<8x2x32xf32>
    %c0_9 = arith.constant 0 : index
    %c0_10 = arith.constant 0 : index
    %c0_11 = arith.constant 0 : index
    %41 = vector.load %arg4[%c0_9, %c0_10, %c0_11] : memref<8x2x32xf32, #tpu.memory_space<vmem>>, vector<8x2x32xf32>
    tpu.vector_store %arg4[%c0_9, %c0_10, %c0_11], %40 {strides = array<i32>} : memref<8x2x32xf32, #tpu.memory_space<vmem>>, vector<8x2x32xf32>,
    return
  }
  func.func @transform_0(%arg0: i32, %arg1: memref<1xi32, #tpu.memory_space<smem>>) -> (i32, i32, i32) {
    %c0_i32 = arith.constant 0 : i32
    %c0_i32_0 = arith.constant 0 : i32
    %c0_i32_1 = arith.constant 0 : i32
    return %arg0, %c0_i32, %c0_i32_0 : i32, i32, i32
  }
  func.func @transform_1(%arg0: i32, %arg1: memref<1xi32, #tpu.memory_space<smem>>) -> (i32, i32, i32) {
    %c0_i32 = arith.constant 0 : i32
    %c0_i32_0 = arith.constant 0 : i32
    %c0_i32_1 = arith.constant 0 : i32
    return %arg0, %c0_i32, %c0_i32_0 : i32, i32, i32
  }
  func.func @transform_2(%arg0: i32, %arg1: memref<1xi32, #tpu.memory_space<smem>>) -> (i32, i32, i32) {
    %c0_i32 = arith.constant 0 : i32
    %c0_i32_0 = arith.constant 0 : i32
    %c0_i32_1 = arith.constant 0 : i32
    return %arg0, %c0_i32, %c0_i32_0 : i32, i32, i32
  }
}

</mosaic_0001>

<llo_original>
// kernel: tpu_custom_call.1
$region0: #{tpu_custom_call.1}
  #allocation0 [shape = 'u32[]', space=smem, size = 0x4, offset = 0x4, fixed_abs, tag = 'smem constant byte address 0x4 - core index']
  #allocation1 [shape = 'u32[72,128]{1,0:T(1,128)}', space=vmem, size = 0x9000, scoped, tag = 'internal scratch']
  #allocation2 [shape = 's32[1]{0}', space=sflag, size = 0x4, scoped, tag = 'scoped memory for tpu_custom_call.1']
  #allocation3 [shape = 's32[1]{0:T(128)S(6)}', space=smem, size = 0x200, scoped, tag = 'prefetched SMEM operand 0']
  %s0 = inlined_call_operand.<no memory space> [shape: s32[1], index: 0, kind: input, shape index: {}]
  %s1 = inlined_call_operand.vmem [shape: f32[8,2,32], index: 1, kind: input, shape index: {}]
  %s2 = inlined_call_operand.vmem [shape: f32[5000,1,32], index: 2, kind: input, shape index: {}]
  %s3 = inlined_call_operand.hbm [shape: f32[8,2,32], index: 3, kind: output, shape index: {}]
  %s4 = sld [smem:[#allocation0]]
  $region18: #{tpu_custom_call.1} parent=0
    _
  %s6 = ssub.s32 1, %s4
  %s7 = scalar_select 0, %s6, %s4
  %8 = sst [smem:[#allocation3]] %s0
  $region1: #{tpu_custom_call.1} parent=0
    #allocation4 [shape = 'u8[8192]{0}', space=vmem, size = 0x2000, scoped, tag = 'output window, operand 0, single buffered']
    #allocation5 [shape = 's32[1]{0}', space=sflag, size = 0x4, scoped, tag = 'scoped memory for tpu_custom_call.1']
    %9 = vsyncpa [#allocation5], 0
    // Predicated region
    $region2: #{tpu_custom_call.1} parent=1 // pred_check
      _
    $region3: #{tpu_custom_call.1} parent=1 // pred_check_branch
      %11 = sbr.rel (0) target = $region5
    $region4: #{tpu_custom_call.1} parent=1 // pred_region
      _
    $region5: #{tpu_custom_call.1} parent=1 // pred_fallthru
      _
    // Predicated region
    $region6: #{tpu_custom_call.1} parent=1 // pred_check
      _
    $region7: #{tpu_custom_call.1} parent=1 // pred_check_branch
      %13 = sbr.rel (0) target = $region9
    $region8: #{tpu_custom_call.1} parent=1 // pred_region
      _
    $region9: #{tpu_custom_call.1} parent=1 // pred_fallthru
      _
    %v14 = vld [vmem:[%s1] sm:$0x3]
    %v15 = vld [vmem:[%s1 + $0x2] sm:$0x3]
    %v16 = vld [vmem:[%s1 + $0x4] sm:$0x3]
    %v17 = vld [vmem:[%s1 + $0x6] sm:$0x3]
    %v18 = vld [vmem:[%s1 + $0x8] sm:$0x3]
    %v19 = vld [vmem:[%s1 + $0xa] sm:$0x3]
    %v20 = vld [vmem:[%s1 + $0xc] sm:$0x3]
    %v21 = vld [vmem:[%s1 + $0xe] sm:$0x3]
    %v22 = vld [vmem:[%s2] sm:$0x1]
    %v23 = vld [vmem:[%s2 + $0x1] sm:$0x1]
    %v24 = vld [vmem:[%s2 + $0x2] sm:$0x1]
    %v25 = vld [vmem:[%s2 + $0x3] sm:$0x1]
    %v26 = vld [vmem:[%s2 + $0x4] sm:$0x1]
    %v27 = vld [vmem:[%s2 + $0x5] sm:$0x1]
    %v28 = vld [vmem:[%s2 + $0x6] sm:$0x1]
    %v29 = vld [vmem:[%s2 + $0x7] sm:$0x1]
    %v38 = vperm.slane %v22, 0
    %v39 = vperm.slane %v23, 0
    %v40 = vperm.slane %v24, 0
    %v41 = vperm.slane %v25, 0
    %v42 = vperm.slane %v26, 0
    %v43 = vperm.slane %v27, 0
    %v44 = vperm.slane %v28, 0
    %v45 = vperm.slane %v29, 0
    %v54 = vadd.f32 %v14, %v38
    %v55 = vadd.f32 %v15, %v39
    %v56 = vadd.f32 %v16, %v40
    %v57 = vadd.f32 %v17, %v41
    %v58 = vadd.f32 %v18, %v42
    %v59 = vadd.f32 %v19, %v43
    %v60 = vadd.f32 %v20, %v44
    %v61 = vadd.f32 %v21, %v45
    %s62 = smul.u32 0, 8
    %v63 = vstv %s62
    %v64 = vadd.s32 %v63, 1
    %v65 = vadd.s32 %v63, 2
    %v66 = vadd.s32 %v63, 3
    %v67 = vadd.s32 %v63, 4
    %v68 = vadd.s32 %v63, 5
    %v69 = vadd.s32 %v63, 6
    %v70 = vadd.s32 %v63, 7
    %v71 = vlaneseq
    %v72 = vshrl.u32 %v71, 7
    %v73 = vlaneseq
    %v74 = vand.u32 %v73, 127
    %v75 = vmul.u32 %v63, 2
    %v76 = vmul.u32 %v64, 2
    %v77 = vmul.u32 %v65, 2
    %v78 = vmul.u32 %v66, 2
    %v79 = vmul.u32 %v67, 2
    %v80 = vmul.u32 %v68, 2
    %v81 = vmul.u32 %v69, 2
    %v82 = vmul.u32 %v70, 2
    %v83 = vadd.s32 %v75, %v72
    %v84 = vadd.s32 %v76, %v72
    %v85 = vadd.s32 %v77, %v72
    %v86 = vadd.s32 %v78, %v72
    %v87 = vadd.s32 %v79, %v72
    %v88 = vadd.s32 %v80, %v72
    %v89 = vadd.s32 %v81, %v72
    %v90 = vadd.s32 %v82, %v72
    %v91 = vmul.u32 %v83, 32
    %v92 = vmul.u32 %v84, 32
    %v93 = vmul.u32 %v85, 32
    %v94 = vmul.u32 %v86, 32
    %v95 = vmul.u32 %v87, 32
    %v96 = vmul.u32 %v88, 32
    %v97 = vmul.u32 %v89, 32
    %v98 = vmul.u32 %v90, 32
    %v99 = vadd.s32 %v91, %v74
    %v100 = vadd.s32 %v92, %v74
    %v101 = vadd.s32 %v93, %v74
    %v102 = vadd.s32 %v94, %v74
    %v103 = vadd.s32 %v95, %v74
    %v104 = vadd.s32 %v96, %v74
    %v105 = vadd.s32 %v97, %v74
    %v106 = vadd.s32 %v98, %v74
    %s107 = sld [smem:[#allocation3]]
    %s108 = smul.u32 %s107, 2654435769
    %v109 = vstv %s108
    %v110 = vadd.s32 %v99, %v109
    %v111 = vadd.s32 %v100, %v109
    %v112 = vadd.s32 %v101, %v109
    %v113 = vadd.s32 %v102, %v109
    %v114 = vadd.s32 %v103, %v109
    %v115 = vadd.s32 %v104, %v109
    %v116 = vadd.s32 %v105, %v109
    %v117 = vadd.s32 %v106, %v109
    %v118 = vshrl.u32 %v110, 16
    %v119 = vshrl.u32 %v111, 16
    %v120 = vshrl.u32 %v112, 16
    %v121 = vshrl.u32 %v113, 16
    %v122 = vshrl.u32 %v114, 16
    %v123 = vshrl.u32 %v115, 16
    %v124 = vshrl.u32 %v116, 16
    %v125 = vshrl.u32 %v117, 16
    %v126 = vxor.u32 %v110, %v118
    %v127 = vxor.u32 %v111, %v119
    %v128 = vxor.u32 %v112, %v120
    %v129 = vxor.u32 %v113, %v121
    %v130 = vxor.u32 %v114, %v122
    %v131 = vxor.u32 %v115, %v123
    %v132 = vxor.u32 %v116, %v124
    %v133 = vxor.u32 %v117, %v125
    %v134 = vmul.u32 %v126, 2146121005
    %v135 = vmul.u32 %v127, 2146121005
    %v136 = vmul.u32 %v128, 2146121005
    %v137 = vmul.u32 %v129, 2146121005
    %v138 = vmul.u32 %v130, 2146121005
    %v139 = vmul.u32 %v131, 2146121005
    %v140 = vmul.u32 %v132, 2146121005
    %v141 = vmul.u32 %v133, 2146121005
    %v142 = vshrl.u32 %v134, 15
    %v143 = vshrl.u32 %v135, 15
    %v144 = vshrl.u32 %v136, 15
    %v145 = vshrl.u32 %v137, 15
    %v146 = vshrl.u32 %v138, 15
    %v147 = vshrl.u32 %v139, 15
    %v148 = vshrl.u32 %v140, 15
    %v149 = vshrl.u32 %v141, 15
    %v150 = vxor.u32 %v134, %v142
    %v151 = vxor.u32 %v135, %v143
    %v152 = vxor.u32 %v136, %v144
    %v153 = vxor.u32 %v137, %v145
    %v154 = vxor.u32 %v138, %v146
    %v155 = vxor.u32 %v139, %v147
    %v156 = vxor.u32 %v140, %v148
    %v157 = vxor.u32 %v141, %v149
    %v158 = vmul.u32 %v150, 2221713035
    %v159 = vmul.u32 %v151, 2221713035
    %v160 = vmul.u32 %v152, 2221713035
    %v161 = vmul.u32 %v153, 2221713035
    %v162 = vmul.u32 %v154, 2221713035
    %v163 = vmul.u32 %v155, 2221713035
    %v164 = vmul.u32 %v156, 2221713035
    %v165 = vmul.u32 %v157, 2221713035
    %v166 = vshrl.u32 %v158, 16
    %v167 = vshrl.u32 %v159, 16
    %v168 = vshrl.u32 %v160, 16
    %v169 = vshrl.u32 %v161, 16
    %v170 = vshrl.u32 %v162, 16
    %v171 = vshrl.u32 %v163, 16
    %v172 = vshrl.u32 %v164, 16
    %v173 = vshrl.u32 %v165, 16
    %v174 = vxor.u32 %v158, %v166
    %v175 = vxor.u32 %v159, %v167
    %v176 = vxor.u32 %v160, %v168
    %v177 = vxor.u32 %v161, %v169
    %v178 = vxor.u32 %v162, %v170
    %v179 = vxor.u32 %v163, %v171
    %v180 = vxor.u32 %v164, %v172
    %v181 = vxor.u32 %v165, %v173
    %v182 = vshrl.u32 %v174, 8
    %v183 = vshrl.u32 %v175, 8
    %v184 = vshrl.u32 %v176, 8
    %v185 = vshrl.u32 %v177, 8
    %v186 = vshrl.u32 %v178, 8
    %v187 = vshrl.u32 %v179, 8
    %v188 = vshrl.u32 %v180, 8
    %v189 = vshrl.u32 %v181, 8
    %vm190 = vcmp.ge.s32.totalorder %v182, 1677722
    %vm191 = vcmp.ge.s32.totalorder %v183, 1677722
    %vm192 = vcmp.ge.s32.totalorder %v184, 1677722
    %vm193 = vcmp.ge.s32.totalorder %v185, 1677722
    %vm194 = vcmp.ge.s32.totalorder %v186, 1677722
    %vm195 = vcmp.ge.s32.totalorder %v187, 1677722
    %vm196 = vcmp.ge.s32.totalorder %v188, 1677722
    %vm197 = vcmp.ge.s32.totalorder %v189, 1677722
    %v198 = vmul.f32 %v54, 1.1111112
    %v199 = vmul.f32 %v55, 1.1111112
    %v200 = vmul.f32 %v56, 1.1111112
    %v201 = vmul.f32 %v57, 1.1111112
    %v202 = vmul.f32 %v58, 1.1111112
    %v203 = vmul.f32 %v59, 1.1111112
    %v204 = vmul.f32 %v60, 1.1111112
    %v205 = vmul.f32 %v61, 1.1111112
    %v206 = vsel %vm190, %v198, 0.0
    %v207 = vsel %vm191, %v199, 0.0
    %v208 = vsel %vm192, %v200, 0.0
    %v209 = vsel %vm193, %v201, 0.0
    %v210 = vsel %vm194, %v202, 0.0
    %v211 = vsel %vm195, %v203, 0.0
    %v212 = vsel %vm196, %v204, 0.0
    %v213 = vsel %vm197, %v205, 0.0
    %vm214 = vcmask 254976
    %215 = vst.msk [vmem:[#allocation4] sm:$0x3] %vm214, %v206
    %216 = vst.msk [vmem:[#allocation4 + $0x2] sm:$0x3] %vm214, %v207
    %217 = vst.msk [vmem:[#allocation4 + $0x4] sm:$0x3] %vm214, %v208
    %218 = vst.msk [vmem:[#allocation4 + $0x6] sm:$0x3] %vm214, %v209
    %219 = vst.msk [vmem:[#allocation4 + $0x8] sm:$0x3] %vm214, %v210
    %220 = vst.msk [vmem:[#allocation4 + $0xa] sm:$0x3] %vm214, %v211
    %221 = vst.msk [vmem:[#allocation4 + $0xc] sm:$0x3] %vm214, %v212
    %222 = vst.msk [vmem:[#allocation4 + $0xe] sm:$0x3] %vm214, %v213
    // Predicated region
    $region10: #{tpu_custom_call.1} parent=1 // pred_check
      _
    $region11: #{tpu_custom_call.1} parent=1 // pred_check_branch
      %224 = sbr.rel (0) target = $region13
    $region12: #{tpu_custom_call.1} parent=1 // pred_region
      %226 = vsyncadd [#allocation5], 0
      %s227 = sshll.u32 [#allocation4], 4
      %s228 = int_to_ptr.vmem [resolvable:$true] %s227
      %s229 = sshll.u32 %s3, 4
      %s230 = int_to_ptr.hbm [resolvable:$true] %s229
      %235 = dma.vmem_to_hbm [thread:$0]  %s228, 256, %s230, [#allocation5], 32, 32, 2
    $region13: #{tpu_custom_call.1} parent=1 // pred_fallthru
      _
    // Predicated region
    $region14: #{tpu_custom_call.1} parent=1 // pred_check
      _
    $region15: #{tpu_custom_call.1} parent=1 // pred_check_branch
      %237 = sbr.rel (0) target = $region17
    $region16: #{tpu_custom_call.1} parent=1 // pred_region
      %239 = dma.done [#allocation5], 256
    $region17: #{tpu_custom_call.1} parent=1 // pred_fallthru
      _
    %240 = vsyncpa [#allocation5], 1

</llo_original>
